<compile_context>
chip_gen: v7x
topology: tpu7x:2x2x1
jax: 0.10.0
libtpu: 0.0.40
codegen_flags: <defaults>
</compile_context>

<pallas_src>
import jax
import jax.numpy as jnp
from jax.experimental import pallas as pl
from jax.experimental.pallas import tpu as pltpu


def layernorm_kernel(x_ref, gb_ref, o_ref):
    # x_ref : (R, C)  rows to normalize over the lane axis C
    # gb_ref: (2, C)  row 0 = gamma (scale), row 1 = beta (shift)
    eps = 1e-05
    inv_c = 1.0 / x_ref.shape[-1]

    x = x_ref[...].astype(jnp.float32)

    # Two-pass, numerically stable statistics (tile is VMEM-resident, so the
    # second reduction costs no extra HBM traffic).
    mean = jnp.sum(x, axis=-1, keepdims=True) * inv_c
    xc = x - mean
    var = jnp.sum(xc * xc, axis=-1, keepdims=True) * inv_c  # biased, like PyTorch
    inv = jax.lax.rsqrt(var + eps)

    g = gb_ref[0:1, :].astype(jnp.float32)
    b = gb_ref[1:2, :].astype(jnp.float32)

    o_ref[...] = (xc * inv * g + b).astype(o_ref.dtype)


def layernorm(x, gamma, beta):
    """x: (N, H, W, C); gamma, beta: (C,). LayerNorm over the last dim."""
    N, H, W, C = x.shape
    R = N * H * W
    x2 = x.reshape(R, C)

    # Pack gamma/beta into a single resident (2, C) parameter block.
    gb = jnp.stack([gamma, beta], axis=0).reshape(2, C)

    out = pl.pallas_call(
        layernorm_kernel,
        out_shape=jax.ShapeDtypeStruct((R, C), x.dtype),
        grid=(1,),
        in_specs=[
            # block_shape == full array dims: exempt from (8,128) divisibility,
            # one DMA in, one DMA out, no padding / masked stores needed.
            pl.BlockSpec((R, C), lambda i: (0, 0)),
            pl.BlockSpec((2, C), lambda i: (0, 0)),
        ],
        out_specs=pl.BlockSpec((R, C), lambda i: (0, 0)),
        compiler_params=pltpu.CompilerParams(
            dimension_semantics=("arbitrary",)
        ),
    )(x2, gb)

    return out.reshape(N, H, W, C)


if __name__ == "__main__":
    key = jax.random.PRNGKey(0)
    # Shape implied by the module's forward: [1, 14, 14, 384]
    x = jax.random.normal(key, (1, 14, 14, 384), dtype=jnp.float32)

    # LayerNorm parameters as initialized by PyTorch: gamma=1, beta=0
    gamma = jnp.ones((384,), dtype=jnp.float32)
    beta = jnp.zeros((384,), dtype=jnp.float32)

    y = layernorm(x, gamma, beta)
    jax.block_until_ready(y)

    # sanity check against a plain-JAX reference (PyTorch-style biased variance)
    mean = jnp.mean(x, axis=-1, keepdims=True)
    var = jnp.mean((x - mean) ** 2, axis=-1, keepdims=True)
    ref = (x - mean) * jax.lax.rsqrt(var + 1e-05) * gamma + beta
    assert jnp.max(jnp.abs(y - ref)) < 1e-4, "mismatch vs reference"

    print("KERNEL_OK")
</pallas_src>

<mosaic_0001>
module attributes {stable_mosaic.version = 11 : i64} {
  func.func @layernorm_kernel(%arg0: i32, %arg1: memref<196x384xf32, #tpu.memory_space<vmem>>, %arg2: memref<2x384xf32, #tpu.memory_space<vmem>>, %arg3: memref<196x384xf32, #tpu.memory_space<vmem>>) attributes {dimension_semantics = [#tpu.dimension_semantics<arbitrary>], iteration_bounds = array<i64: 1>, scalar_prefetch = 0 : i64, scratch_operands = 0 : i64, tpu.core_type = #tpu.core_type<tc>, window_params = [{pipeline_mode = #tpu.pipeline_mode<synchronous>, transform_indices = @transform_0, window_bounds = array<i64: 196, 384>}, {pipeline_mode = #tpu.pipeline_mode<synchronous>, transform_indices = @transform_1, window_bounds = array<i64: 2, 384>}, {pipeline_mode = #tpu.pipeline_mode<synchronous>, transform_indices = @transform_2, window_bounds = array<i64: 196, 384>}]} {
    %c0 = arith.constant 0 : index
    %c0_0 = arith.constant 0 : index
    %0 = vector.load %arg1[%c0, %c0_0] : memref<196x384xf32, #tpu.memory_space<vmem>>, vector<196x384xf32>
    %cst = arith.constant dense<0.000000e+00> : vector<196xf32>
    %1 = vector.multi_reduction <add>, %0, %cst [1] : vector<196x384xf32> to vector<196xf32>
    %2 = vector.shape_cast %1 : vector<196xf32> to vector<196x1xf32>
    %cst_1 = arith.constant 0.00260416674 : f32
    %3 = vector.broadcast %cst_1 : f32 to vector<196x1xf32>
    %4 = arith.mulf %2, %3 : vector<196x1xf32>
    %5 = vector.broadcast %4 : vector<196x1xf32> to vector<196x384xf32>
    %6 = arith.subf %0, %5 : vector<196x384xf32>
    %7 = arith.mulf %6, %6 : vector<196x384xf32>
    %cst_2 = arith.constant dense<0.000000e+00> : vector<196xf32>
    %8 = vector.multi_reduction <add>, %7, %cst_2 [1] : vector<196x384xf32> to vector<196xf32>
    %9 = vector.shape_cast %8 : vector<196xf32> to vector<196x1xf32>
    %cst_3 = arith.constant 0.00260416674 : f32
    %10 = vector.broadcast %cst_3 : f32 to vector<196x1xf32>
    %11 = arith.mulf %9, %10 : vector<196x1xf32>
    %cst_4 = arith.constant 9.99999974E-6 : f32
    %12 = vector.broadcast %cst_4 : f32 to vector<196x1xf32>
    %13 = arith.addf %11, %12 : vector<196x1xf32>
    %14 = math.rsqrt %13 : vector<196x1xf32>
    %c0_5 = arith.constant 0 : index
    %c0_6 = arith.constant 0 : index
    %15 = vector.load %arg2[%c0_5, %c0_6] : memref<2x384xf32, #tpu.memory_space<vmem>>, vector<1x384xf32>
    %c1 = arith.constant 1 : index
    %c0_7 = arith.constant 0 : index
    %16 = vector.load %arg2[%c1, %c0_7] : memref<2x384xf32, #tpu.memory_space<vmem>>, vector<1x384xf32>
    %17 = vector.broadcast %14 : vector<196x1xf32> to vector<196x384xf32>
    %18 = arith.mulf %6, %17 : vector<196x384xf32>
    %19 = vector.broadcast %15 : vector<1x384xf32> to vector<196x384xf32>
    %20 = arith.mulf %18, %19 : vector<196x384xf32>
    %21 = vector.broadcast %16 : vector<1x384xf32> to vector<196x384xf32>
    %22 = arith.addf %20, %21 : vector<196x384xf32>
    %c0_8 = arith.constant 0 : index
    %c0_9 = arith.constant 0 : index
    %23 = vector.load %arg3[%c0_8, %c0_9] : memref<196x384xf32, #tpu.memory_space<vmem>>, vector<196x384xf32>
    tpu.vector_store %arg3[%c0_8, %c0_9], %22 {strides = array<i32>} : memref<196x384xf32, #tpu.memory_space<vmem>>, vector<196x384xf32>,
    return
  }
  func.func @transform_0(%arg0: i32) -> (i32, i32) {
    %c0_i32 = arith.constant 0 : i32
    %c0_i32_0 = arith.constant 0 : i32
    %c0_i32_1 = arith.constant 0 : i32
    return %c0_i32, %c0_i32_0 : i32, i32
  }
  func.func @transform_1(%arg0: i32) -> (i32, i32) {
    %c0_i32 = arith.constant 0 : i32
    %c0_i32_0 = arith.constant 0 : i32
    %c0_i32_1 = arith.constant 0 : i32
    return %c0_i32, %c0_i32_0 : i32, i32
  }
  func.func @transform_2(%arg0: i32) -> (i32, i32) {
    %c0_i32 = arith.constant 0 : i32
    %c0_i32_0 = arith.constant 0 : i32
    %c0_i32_1 = arith.constant 0 : i32
    return %c0_i32, %c0_i32_0 : i32, i32
  }
}

</mosaic_0001>

<llo_original>
// kernel: tpu_custom_call.1
$region0: #{tpu_custom_call.1}
  #allocation0 [shape = 'u32[]', space=smem, size = 0x4, offset = 0x4, fixed_abs, tag = 'smem constant byte address 0x4 - core index']
  #allocation1 [shape = 'u32[144,128]{1,0:T(1,128)}', space=vmem, size = 0x12000, scoped, tag = 'internal scratch']
  %s0 = inlined_call_operand.hbm [shape: f32[196,384], index: 0, kind: input, shape index: {}]
  %s1 = inlined_call_operand.hbm [shape: f32[2,384], index: 1, kind: input, shape index: {}]
  %s2 = inlined_call_operand.hbm [shape: f32[196,384], index: 2, kind: output, shape index: {}]
  %s3 = sld [smem:[#allocation0]]
  $region26: #{tpu_custom_call.1} parent=0
    _
  %s5 = ssub.s32 1, %s3
  %s6 = scalar_select 0, %s5, %s3
  $region1: #{tpu_custom_call.1} parent=0
    #allocation2 [shape = 'u8[307200]{0}', space=vmem, size = 0x4b000, scoped, tag = 'input window, operand 0, single buffered']
    #allocation3 [shape = 's32[1]{0}', space=sflag, size = 0x4, scoped, tag = 'scoped memory for tpu_custom_call.1']
    #allocation4 [shape = 's32[1]{0}', space=sflag, size = 0x4, scoped, tag = 'scoped memory for tpu_custom_call.1']
    #allocation5 [shape = 'u8[3072]{0}', space=vmem, size = 0xc00, scoped, tag = 'input window, operand 1, single buffered']
    #allocation6 [shape = 's32[1]{0}', space=sflag, size = 0x4, scoped, tag = 'scoped memory for tpu_custom_call.1']
    #allocation7 [shape = 'u8[307200]{0}', space=vmem, size = 0x4b000, scoped, tag = 'output window, operand 0, single buffered']
    %7 = vsyncpa [#allocation3], 0
    %8 = vsyncpa [#allocation6], 0
    %9 = vsyncpa [#allocation4], 0
    // Predicated region
    $region2: #{tpu_custom_call.1} parent=1 // pred_check
      _
    $region3: #{tpu_custom_call.1} parent=1 // pred_check_branch
      %11 = sbr.rel (0) target = $region5
    $region4: #{tpu_custom_call.1} parent=1 // pred_region
      %s13 = ssub.s32 9600, 9600
      %14 = vsyncadd [#allocation3], %s13
      %s15 = sshll.u32 [#allocation2], 4
      %s16 = int_to_ptr.vmem [resolvable:$true] %s15
      %21 = dma.hbm_to_vmem [thread:$0]  %s0, 9600, %s16, [#allocation3], 384, 384, 24
    $region5: #{tpu_custom_call.1} parent=1 // pred_fallthru
      _
    // Predicated region
    $region6: #{tpu_custom_call.1} parent=1 // pred_check
      _
    $region7: #{tpu_custom_call.1} parent=1 // pred_check_branch
      %23 = sbr.rel (0) target = $region9
    $region8: #{tpu_custom_call.1} parent=1 // pred_region
      %s25 = ssub.s32 96, 96
      %26 = vsyncadd [#allocation6], %s25
      %s28 = sshll.u32 [#allocation5], 4
      %s29 = int_to_ptr.vmem [resolvable:$true] %s28
      %31 = dma.hbm_to_vmem [thread:$0]  %s1, 96, %s29, [#allocation6]
    $region9: #{tpu_custom_call.1} parent=1 // pred_fallthru
      _
    // Predicated region
    $region10: #{tpu_custom_call.1} parent=1 // pred_check
      _
    $region11: #{tpu_custom_call.1} parent=1 // pred_check_branch
      %33 = sbr.rel (0) target = $region13
    $region12: #{tpu_custom_call.1} parent=1 // pred_region
      %34 = dma.done [#allocation3], 9600
    $region13: #{tpu_custom_call.1} parent=1 // pred_fallthru
      _
    // Predicated region
    $region14: #{tpu_custom_call.1} parent=1 // pred_check
      _
    $region15: #{tpu_custom_call.1} parent=1 // pred_check_branch
      %36 = sbr.rel (0) target = $region17
    $region16: #{tpu_custom_call.1} parent=1 // pred_region
      %37 = dma.done [#allocation6], 96
    $region17: #{tpu_custom_call.1} parent=1 // pred_fallthru
      _
    %v38 = vld [vmem:[#allocation2] sm:$0xff]
    %v39 = vld [vmem:[#allocation2 + $0x8] sm:$0xff]
    %v40 = vld [vmem:[#allocation2 + $0x10] sm:$0xff]
    %v41 = vld [vmem:[#allocation2 + $0x18] sm:$0xff]
    %v42 = vld [vmem:[#allocation2 + $0x20] sm:$0xff]
    %v43 = vld [vmem:[#allocation2 + $0x28] sm:$0xff]
    %v44 = vld [vmem:[#allocation2 + $0x30] sm:$0xff]
    %v45 = vld [vmem:[#allocation2 + $0x38] sm:$0xff]
    %v46 = vld [vmem:[#allocation2 + $0x40] sm:$0xff]
    %v47 = vld [vmem:[#allocation2 + $0x48] sm:$0xff]
    %v48 = vld [vmem:[#allocation2 + $0x50] sm:$0xff]
    %v49 = vld [vmem:[#allocation2 + $0x58] sm:$0xff]
    %v50 = vld [vmem:[#allocation2 + $0x60] sm:$0xff]
    %v51 = vld [vmem:[#allocation2 + $0x68] sm:$0xff]
    %v52 = vld [vmem:[#allocation2 + $0x70] sm:$0xff]
    %v53 = vld [vmem:[#allocation2 + $0x78] sm:$0xff]
    %v54 = vld [vmem:[#allocation2 + $0x80] sm:$0xff]
    %v55 = vld [vmem:[#allocation2 + $0x88] sm:$0xff]
    %v56 = vld [vmem:[#allocation2 + $0x90] sm:$0xff]
    %v57 = vld [vmem:[#allocation2 + $0x98] sm:$0xff]
    %v58 = vld [vmem:[#allocation2 + $0xa0] sm:$0xff]
    %v59 = vld [vmem:[#allocation2 + $0xa8] sm:$0xff]
    %v60 = vld [vmem:[#allocation2 + $0xb0] sm:$0xff]
    %v61 = vld [vmem:[#allocation2 + $0xb8] sm:$0xff]
    %v62 = vld [vmem:[#allocation2 + $0xc0] sm:$0xff]
    %v63 = vld [vmem:[#allocation2 + $0xc8] sm:$0xff]
    %v64 = vld [vmem:[#allocation2 + $0xd0] sm:$0xff]
    %v65 = vld [vmem:[#allocation2 + $0xd8] sm:$0xff]
    %v66 = vld [vmem:[#allocation2 + $0xe0] sm:$0xff]
    %v67 = vld [vmem:[#allocation2 + $0xe8] sm:$0xff]
    %v68 = vld [vmem:[#allocation2 + $0xf0] sm:$0xff]
    %v69 = vld [vmem:[#allocation2 + $0xf8] sm:$0xff]
    %v70 = vld [vmem:[#allocation2 + $0x100] sm:$0xff]
    %v71 = vld [vmem:[#allocation2 + $0x108] sm:$0xff]
    %v72 = vld [vmem:[#allocation2 + $0x110] sm:$0xff]
    %v73 = vld [vmem:[#allocation2 + $0x118] sm:$0xff]
    %v74 = vld [vmem:[#allocation2 + $0x120] sm:$0xff]
    %v75 = vld [vmem:[#allocation2 + $0x128] sm:$0xff]
    %v76 = vld [vmem:[#allocation2 + $0x130] sm:$0xff]
    %v77 = vld [vmem:[#allocation2 + $0x138] sm:$0xff]
    %v78 = vld [vmem:[#allocation2 + $0x140] sm:$0xff]
    %v79 = vld [vmem:[#allocation2 + $0x148] sm:$0xff]
    %v80 = vld [vmem:[#allocation2 + $0x150] sm:$0xff]
    %v81 = vld [vmem:[#allocation2 + $0x158] sm:$0xff]
    %v82 = vld [vmem:[#allocation2 + $0x160] sm:$0xff]
    %v83 = vld [vmem:[#allocation2 + $0x168] sm:$0xff]
    %v84 = vld [vmem:[#allocation2 + $0x170] sm:$0xff]
    %v85 = vld [vmem:[#allocation2 + $0x178] sm:$0xff]
    %v86 = vld [vmem:[#allocation2 + $0x180] sm:$0xff]
    %v87 = vld [vmem:[#allocation2 + $0x188] sm:$0xff]
    %v88 = vld [vmem:[#allocation2 + $0x190] sm:$0xff]
    %v89 = vld [vmem:[#allocation2 + $0x198] sm:$0xff]
    %v90 = vld [vmem:[#allocation2 + $0x1a0] sm:$0xff]
    %v91 = vld [vmem:[#allocation2 + $0x1a8] sm:$0xff]
    %v92 = vld [vmem:[#allocation2 + $0x1b0] sm:$0xff]
    %v93 = vld [vmem:[#allocation2 + $0x1b8] sm:$0xff]
    %v94 = vld [vmem:[#allocation2 + $0x1c0] sm:$0xff]
    %v95 = vld [vmem:[#allocation2 + $0x1c8] sm:$0xff]
    %v96 = vld [vmem:[#allocation2 + $0x1d0] sm:$0xff]
    %v97 = vld [vmem:[#allocation2 + $0x1d8] sm:$0xff]
    %v98 = vld [vmem:[#allocation2 + $0x1e0] sm:$0xff]
    %v99 = vld [vmem:[#allocation2 + $0x1e8] sm:$0xff]
    %v100 = vld [vmem:[#allocation2 + $0x1f0] sm:$0xff]
    %v101 = vld [vmem:[#allocation2 + $0x1f8] sm:$0xff]
    %v102 = vld [vmem:[#allocation2 + $0x200] sm:$0xff]
    %v103 = vld [vmem:[#allocation2 + $0x208] sm:$0xff]
    %v104 = vld [vmem:[#allocation2 + $0x210] sm:$0xff]
    %v105 = vld [vmem:[#allocation2 + $0x218] sm:$0xff]
    %v106 = vld [vmem:[#allocation2 + $0x220] sm:$0xff]
    %v107 = vld [vmem:[#allocation2 + $0x228] sm:$0xff]
    %v108 = vld [vmem:[#allocation2 + $0x230] sm:$0xff]
    %v109 = vld [vmem:[#allocation2 + $0x238] sm:$0xff]
    %v110 = vld [vmem:[#allocation2 + $0x240] sm:$0xf]
    %v111 = vld [vmem:[#allocation2 + $0x248] sm:$0xf]
    %v112 = vld [vmem:[#allocation2 + $0x250] sm:$0xf]
    %v113 = vadd.f32 %v38, %v39
    %v114 = vadd.f32 %v113, %v40
    %115 = vadd.xlane.f32.xlu0 %v114
    %v116 = vpop.xlane.xlu0 %115
    %v117 = vadd.f32 %v41, %v42
    %v118 = vadd.f32 %v117, %v43
    %119 = vadd.xlane.f32.xlu0 %v118
    %v120 = vpop.xlane.xlu0 %119
    %v121 = vadd.f32 %v44, %v45
    %v122 = vadd.f32 %v121, %v46
    %123 = vadd.xlane.f32.xlu0 %v122
    %v124 = vpop.xlane.xlu0 %123
    %v125 = vadd.f32 %v47, %v48
    %v126 = vadd.f32 %v125, %v49
    %127 = vadd.xlane.f32.xlu0 %v126
    %v128 = vpop.xlane.xlu0 %127
    %v129 = vadd.f32 %v50, %v51
    %v130 = vadd.f32 %v129, %v52
    %131 = vadd.xlane.f32.xlu0 %v130
    %v132 = vpop.xlane.xlu0 %131
    %v133 = vadd.f32 %v53, %v54
    %v134 = vadd.f32 %v133, %v55
    %135 = vadd.xlane.f32.xlu0 %v134
    %v136 = vpop.xlane.xlu0 %135
    %v137 = vadd.f32 %v56, %v57
    %v138 = vadd.f32 %v137, %v58
    %139 = vadd.xlane.f32.xlu0 %v138
    %v140 = vpop.xlane.xlu0 %139
    %v141 = vadd.f32 %v59, %v60
    %v142 = vadd.f32 %v141, %v61
    %143 = vadd.xlane.f32.xlu0 %v142
    %v144 = vpop.xlane.xlu0 %143
    %v145 = vadd.f32 %v62, %v63
    %v146 = vadd.f32 %v145, %v64
    %147 = vadd.xlane.f32.xlu0 %v146
    %v148 = vpop.xlane.xlu0 %147
    %v149 = vadd.f32 %v65, %v66
    %v150 = vadd.f32 %v149, %v67
    %151 = vadd.xlane.f32.xlu0 %v150
    %v152 = vpop.xlane.xlu0 %151
    %v153 = vadd.f32 %v68, %v69
    %v154 = vadd.f32 %v153, %v70
    %155 = vadd.xlane.f32.xlu0 %v154
    %v156 = vpop.xlane.xlu0 %155
    %v157 = vadd.f32 %v71, %v72
    %v158 = vadd.f32 %v157, %v73
    %159 = vadd.xlane.f32.xlu0 %v158
    %v160 = vpop.xlane.xlu0 %159
    %v161 = vadd.f32 %v74, %v75
    %v162 = vadd.f32 %v161, %v76
    %163 = vadd.xlane.f32.xlu0 %v162
    %v164 = vpop.xlane.xlu0 %163
    %v165 = vadd.f32 %v77, %v78
    %v166 = vadd.f32 %v165, %v79
    %167 = vadd.xlane.f32.xlu0 %v166
    %v168 = vpop.xlane.xlu0 %167
    %v169 = vadd.f32 %v80, %v81
    %v170 = vadd.f32 %v169, %v82
    %171 = vadd.xlane.f32.xlu0 %v170
    %v172 = vpop.xlane.xlu0 %171
    %v173 = vadd.f32 %v83, %v84
    %v174 = vadd.f32 %v173, %v85
    %175 = vadd.xlane.f32.xlu0 %v174
    %v176 = vpop.xlane.xlu0 %175
    %v177 = vadd.f32 %v86, %v87
    %v178 = vadd.f32 %v177, %v88
    %179 = vadd.xlane.f32.xlu0 %v178
    %v180 = vpop.xlane.xlu0 %179
    %v181 = vadd.f32 %v89, %v90
    %v182 = vadd.f32 %v181, %v91
    %183 = vadd.xlane.f32.xlu0 %v182
    %v184 = vpop.xlane.xlu0 %183
    %v185 = vadd.f32 %v92, %v93
    %v186 = vadd.f32 %v185, %v94
    %187 = vadd.xlane.f32.xlu0 %v186
    %v188 = vpop.xlane.xlu0 %187
    %v189 = vadd.f32 %v95, %v96
    %v190 = vadd.f32 %v189, %v97
    %191 = vadd.xlane.f32.xlu0 %v190
    %v192 = vpop.xlane.xlu0 %191
    %v193 = vadd.f32 %v98, %v99
    %v194 = vadd.f32 %v193, %v100
    %195 = vadd.xlane.f32.xlu0 %v194
    %v196 = vpop.xlane.xlu0 %195
    %v197 = vadd.f32 %v101, %v102
    %v198 = vadd.f32 %v197, %v103
    %199 = vadd.xlane.f32.xlu0 %v198
    %v200 = vpop.xlane.xlu0 %199
    %v201 = vadd.f32 %v104, %v105
    %v202 = vadd.f32 %v201, %v106
    %203 = vadd.xlane.f32.xlu0 %v202
    %v204 = vpop.xlane.xlu0 %203
    %v205 = vadd.f32 %v107, %v108
    %v206 = vadd.f32 %v205, %v109
    %207 = vadd.xlane.f32.xlu0 %v206
    %v208 = vpop.xlane.xlu0 %207
    %vm209 = vcmask 1043456
    %v210 = vsel %vm209, %v110, 0.0
    %v211 = vsel %vm209, %v111, 0.0
    %v212 = vadd.f32 %v210, %v211
    %v213 = vsel %vm209, %v112, 0.0
    %v214 = vadd.f32 %v212, %v213
    %215 = vadd.xlane.f32.xlu0 %v214
    %v216 = vpop.xlane.xlu0 %215
    %v217 = vmul.f32 %v116, 0.0026041667
    %v218 = vmul.f32 %v120, 0.0026041667
    %v219 = vmul.f32 %v124, 0.0026041667
    %v220 = vmul.f32 %v128, 0.0026041667
    %v221 = vmul.f32 %v132, 0.0026041667
    %v222 = vmul.f32 %v136, 0.0026041667
    %v223 = vmul.f32 %v140, 0.0026041667
    %v224 = vmul.f32 %v144, 0.0026041667
    %v225 = vmul.f32 %v148, 0.0026041667
    %v226 = vmul.f32 %v152, 0.0026041667
    %v227 = vmul.f32 %v156, 0.0026041667
    %v228 = vmul.f32 %v160, 0.0026041667
    %v229 = vmul.f32 %v164, 0.0026041667
    %v230 = vmul.f32 %v168, 0.0026041667
    %v231 = vmul.f32 %v172, 0.0026041667
    %v232 = vmul.f32 %v176, 0.0026041667
    %v233 = vmul.f32 %v180, 0.0026041667
    %v234 = vmul.f32 %v184, 0.0026041667
    %v235 = vmul.f32 %v188, 0.0026041667
    %v236 = vmul.f32 %v192, 0.0026041667
    %v237 = vmul.f32 %v196, 0.0026041667
    %v238 = vmul.f32 %v200, 0.0026041667
    %v239 = vmul.f32 %v204, 0.0026041667
    %v240 = vmul.f32 %v208, 0.0026041667
    %v241 = vmul.f32 %v216, 0.0026041667
    %v242 = vsub.f32 %v38, %v217
    %v243 = vsub.f32 %v39, %v217
    %v244 = vsub.f32 %v40, %v217
    %v245 = vsub.f32 %v41, %v218
    %v246 = vsub.f32 %v42, %v218
    %v247 = vsub.f32 %v43, %v218
    %v248 = vsub.f32 %v44, %v219
    %v249 = vsub.f32 %v45, %v219
    %v250 = vsub.f32 %v46, %v219
    %v251 = vsub.f32 %v47, %v220
    %v252 = vsub.f32 %v48, %v220
    %v253 = vsub.f32 %v49, %v220
    %v254 = vsub.f32 %v50, %v221
    %v255 = vsub.f32 %v51, %v221
    %v256 = vsub.f32 %v52, %v221
    %v257 = vsub.f32 %v53, %v222
    %v258 = vsub.f32 %v54, %v222
    %v259 = vsub.f32 %v55, %v222
    %v260 = vsub.f32 %v56, %v223
    %v261 = vsub.f32 %v57, %v223
    %v262 = vsub.f32 %v58, %v223
    %v263 = vsub.f32 %v59, %v224
    %v264 = vsub.f32 %v60, %v224
    %v265 = vsub.f32 %v61, %v224
    %v266 = vsub.f32 %v62, %v225
    %v267 = vsub.f32 %v63, %v225
    %v268 = vsub.f32 %v64, %v225
    %v269 = vsub.f32 %v65, %v226
    %v270 = vsub.f32 %v66, %v226
    %v271 = vsub.f32 %v67, %v226
    %v272 = vsub.f32 %v68, %v227
    %v273 = vsub.f32 %v69, %v227
    %v274 = vsub.f32 %v70, %v227
    %v275 = vsub.f32 %v71, %v228
    %v276 = vsub.f32 %v72, %v228
    %v277 = vsub.f32 %v73, %v228
    %v278 = vsub.f32 %v74, %v229
    %v279 = vsub.f32 %v75, %v229
    %v280 = vsub.f32 %v76, %v229
    %v281 = vsub.f32 %v77, %v230
    %v282 = vsub.f32 %v78, %v230
    %v283 = vsub.f32 %v79, %v230
    %v284 = vsub.f32 %v80, %v231
    %v285 = vsub.f32 %v81, %v231
    %v286 = vsub.f32 %v82, %v231
    %v287 = vsub.f32 %v83, %v232
    %v288 = vsub.f32 %v84, %v232
    %v289 = vsub.f32 %v85, %v232
    %v290 = vsub.f32 %v86, %v233
    %v291 = vsub.f32 %v87, %v233
    %v292 = vsub.f32 %v88, %v233
    %v293 = vsub.f32 %v89, %v234
    %v294 = vsub.f32 %v90, %v234
    %v295 = vsub.f32 %v91, %v234
    %v296 = vsub.f32 %v92, %v235
    %v297 = vsub.f32 %v93, %v235
    %v298 = vsub.f32 %v94, %v235
    %v299 = vsub.f32 %v95, %v236
    %v300 = vsub.f32 %v96, %v236
    %v301 = vsub.f32 %v97, %v236
    %v302 = vsub.f32 %v98, %v237
    %v303 = vsub.f32 %v99, %v237
    %v304 = vsub.f32 %v100, %v237
    %v305 = vsub.f32 %v101, %v238
    %v306 = vsub.f32 %v102, %v238
    %v307 = vsub.f32 %v103, %v238
    %v308 = vsub.f32 %v104, %v239
    %v309 = vsub.f32 %v105, %v239
    %v310 = vsub.f32 %v106, %v239
    %v311 = vsub.f32 %v107, %v240
    %v312 = vsub.f32 %v108, %v240
    %v313 = vsub.f32 %v109, %v240
    %v314 = vsub.f32 %v110, %v241
    %v315 = vsub.f32 %v111, %v241
    %v316 = vsub.f32 %v112, %v241
    %v317 = vmul.f32 %v242, %v242
    %v318 = vmul.f32 %v243, %v243
    %v319 = vmul.f32 %v244, %v244
    %v320 = vmul.f32 %v245, %v245
    %v321 = vmul.f32 %v246, %v246
    %v322 = vmul.f32 %v247, %v247
    %v323 = vmul.f32 %v248, %v248
    %v324 = vmul.f32 %v249, %v249
    %v325 = vmul.f32 %v250, %v250
    %v326 = vmul.f32 %v251, %v251
    %v327 = vmul.f32 %v252, %v252
    %v328 = vmul.f32 %v253, %v253
    %v329 = vmul.f32 %v254, %v254
    %v330 = vmul.f32 %v255, %v255
    %v331 = vmul.f32 %v256, %v256
    %v332 = vmul.f32 %v257, %v257
    %v333 = vmul.f32 %v258, %v258
    %v334 = vmul.f32 %v259, %v259
    %v335 = vmul.f32 %v260, %v260
    %v336 = vmul.f32 %v261, %v261
    %v337 = vmul.f32 %v262, %v262
    %v338 = vmul.f32 %v263, %v263
    %v339 = vmul.f32 %v264, %v264
    %v340 = vmul.f32 %v265, %v265
    %v341 = vmul.f32 %v266, %v266
    %v342 = vmul.f32 %v267, %v267
    %v343 = vmul.f32 %v268, %v268
    %v344 = vmul.f32 %v269, %v269
    %v345 = vmul.f32 %v270, %v270
    %v346 = vmul.f32 %v271, %v271
    %v347 = vmul.f32 %v272, %v272
    %v348 = vmul.f32 %v273, %v273
    %v349 = vmul.f32 %v274, %v274
    %v350 = vmul.f32 %v275, %v275
    %v351 = vmul.f32 %v276, %v276
    %v352 = vmul.f32 %v277, %v277
    %v353 = vmul.f32 %v278, %v278
    %v354 = vmul.f32 %v279, %v279
    %v355 = vmul.f32 %v280, %v280
    %v356 = vmul.f32 %v281, %v281
    %v357 = vmul.f32 %v282, %v282
    %v358 = vmul.f32 %v283, %v283
    %v359 = vmul.f32 %v284, %v284
    %v360 = vmul.f32 %v285, %v285
    %v361 = vmul.f32 %v286, %v286
    %v362 = vmul.f32 %v287, %v287
    %v363 = vmul.f32 %v288, %v288
    %v364 = vmul.f32 %v289, %v289
    %v365 = vmul.f32 %v290, %v290
    %v366 = vmul.f32 %v291, %v291
    %v367 = vmul.f32 %v292, %v292
    %v368 = vmul.f32 %v293, %v293
    %v369 = vmul.f32 %v294, %v294
    %v370 = vmul.f32 %v295, %v295
    %v371 = vmul.f32 %v296, %v296
    %v372 = vmul.f32 %v297, %v297
    %v373 = vmul.f32 %v298, %v298
    %v374 = vmul.f32 %v299, %v299
    %v375 = vmul.f32 %v300, %v300
    %v376 = vmul.f32 %v301, %v301
    %v377 = vmul.f32 %v302, %v302
    %v378 = vmul.f32 %v303, %v303
    %v379 = vmul.f32 %v304, %v304
    %v380 = vmul.f32 %v305, %v305
    %v381 = vmul.f32 %v306, %v306
    %v382 = vmul.f32 %v307, %v307
    %v383 = vmul.f32 %v308, %v308
    %v384 = vmul.f32 %v309, %v309
    %v385 = vmul.f32 %v310, %v310
    %v386 = vmul.f32 %v311, %v311
    %v387 = vmul.f32 %v312, %v312
    %v388 = vmul.f32 %v313, %v313
    %v389 = vmul.f32 %v314, %v314
    %v390 = vmul.f32 %v315, %v315
    %v391 = vmul.f32 %v316, %v316
    %v392 = vadd.f32 %v317, %v318
    %v393 = vadd.f32 %v392, %v319
    %394 = vadd.xlane.f32.xlu0 %v393
    %v395 = vpop.xlane.xlu0 %394
    %v396 = vadd.f32 %v320, %v321
    %v397 = vadd.f32 %v396, %v322
    %398 = vadd.xlane.f32.xlu0 %v397
    %v399 = vpop.xlane.xlu0 %398
    %v400 = vadd.f32 %v323, %v324
    %v401 = vadd.f32 %v400, %v325
    %402 = vadd.xlane.f32.xlu0 %v401
    %v403 = vpop.xlane.xlu0 %402
    %v404 = vadd.f32 %v326, %v327
    %v405 = vadd.f32 %v404, %v328
    %406 = vadd.xlane.f32.xlu0 %v405
    %v407 = vpop.xlane.xlu0 %406
    %v408 = vadd.f32 %v329, %v330
    %v409 = vadd.f32 %v408, %v331
    %410 = vadd.xlane.f32.xlu0 %v409
    %v411 = vpop.xlane.xlu0 %410
    %v412 = vadd.f32 %v332, %v333
    %v413 = vadd.f32 %v412, %v334
    %414 = vadd.xlane.f32.xlu0 %v413
    %v415 = vpop.xlane.xlu0 %414
    %v416 = vadd.f32 %v335, %v336
    %v417 = vadd.f32 %v416, %v337
    %418 = vadd.xlane.f32.xlu0 %v417
    %v419 = vpop.xlane.xlu0 %418
    %v420 = vadd.f32 %v338, %v339
    %v421 = vadd.f32 %v420, %v340
    %422 = vadd.xlane.f32.xlu0 %v421
    %v423 = vpop.xlane.xlu0 %422
    %v424 = vadd.f32 %v341, %v342
    %v425 = vadd.f32 %v424, %v343
    %426 = vadd.xlane.f32.xlu0 %v425
    %v427 = vpop.xlane.xlu0 %426
    %v428 = vadd.f32 %v344, %v345
    %v429 = vadd.f32 %v428, %v346
    %430 = vadd.xlane.f32.xlu0 %v429
    %v431 = vpop.xlane.xlu0 %430
    %v432 = vadd.f32 %v347, %v348
    %v433 = vadd.f32 %v432, %v349
    %434 = vadd.xlane.f32.xlu0 %v433
    %v435 = vpop.xlane.xlu0 %434
    %v436 = vadd.f32 %v350, %v351
    %v437 = vadd.f32 %v436, %v352
    %438 = vadd.xlane.f32.xlu0 %v437
    %v439 = vpop.xlane.xlu0 %438
    %v440 = vadd.f32 %v353, %v354
    %v441 = vadd.f32 %v440, %v355
    %442 = vadd.xlane.f32.xlu0 %v441
    %v443 = vpop.xlane.xlu0 %442
    %v444 = vadd.f32 %v356, %v357
    %v445 = vadd.f32 %v444, %v358
    %446 = vadd.xlane.f32.xlu0 %v445
    %v447 = vpop.xlane.xlu0 %446
    %v448 = vadd.f32 %v359, %v360
    %v449 = vadd.f32 %v448, %v361
    %450 = vadd.xlane.f32.xlu0 %v449
    %v451 = vpop.xlane.xlu0 %450
    %v452 = vadd.f32 %v362, %v363
    %v453 = vadd.f32 %v452, %v364
    %454 = vadd.xlane.f32.xlu0 %v453
    %v455 = vpop.xlane.xlu0 %454
    %v456 = vadd.f32 %v365, %v366
    %v457 = vadd.f32 %v456, %v367
    %458 = vadd.xlane.f32.xlu0 %v457
    %v459 = vpop.xlane.xlu0 %458
    %v460 = vadd.f32 %v368, %v369
    %v461 = vadd.f32 %v460, %v370
    %462 = vadd.xlane.f32.xlu0 %v461
    %v463 = vpop.xlane.xlu0 %462
    %v464 = vadd.f32 %v371, %v372
    %v465 = vadd.f32 %v464, %v373
    %466 = vadd.xlane.f32.xlu0 %v465
    %v467 = vpop.xlane.xlu0 %466
    %v468 = vadd.f32 %v374, %v375
    %v469 = vadd.f32 %v468, %v376
    %470 = vadd.xlane.f32.xlu0 %v469
    %v471 = vpop.xlane.xlu0 %470
    %v472 = vadd.f32 %v377, %v378
    %v473 = vadd.f32 %v472, %v379
    %474 = vadd.xlane.f32.xlu0 %v473
    %v475 = vpop.xlane.xlu0 %474
    %v476 = vadd.f32 %v380, %v381
    %v477 = vadd.f32 %v476, %v382
    %478 = vadd.xlane.f32.xlu0 %v477
    %v479 = vpop.xlane.xlu0 %478
    %v480 = vadd.f32 %v383, %v384
    %v481 = vadd.f32 %v480, %v385
    %482 = vadd.xlane.f32.xlu0 %v481
    %v483 = vpop.xlane.xlu0 %482
    %v484 = vadd.f32 %v386, %v387
    %v485 = vadd.f32 %v484, %v388
    %486 = vadd.xlane.f32.xlu0 %v485
    %v487 = vpop.xlane.xlu0 %486
    %v488 = vsel %vm209, %v389, 0.0
    %v489 = vsel %vm209, %v390, 0.0
    %v490 = vadd.f32 %v488, %v489
    %v491 = vsel %vm209, %v391, 0.0
    %v492 = vadd.f32 %v490, %v491
    %493 = vadd.xlane.f32.xlu0 %v492
    %v494 = vpop.xlane.xlu0 %493
    %v495 = vmul.f32 %v395, 0.0026041667
    %v496 = vmul.f32 %v399, 0.0026041667
    %v497 = vmul.f32 %v403, 0.0026041667
    %v498 = vmul.f32 %v407, 0.0026041667
    %v499 = vmul.f32 %v411, 0.0026041667
    %v500 = vmul.f32 %v415, 0.0026041667
    %v501 = vmul.f32 %v419, 0.0026041667
    %v502 = vmul.f32 %v423, 0.0026041667
    %v503 = vmul.f32 %v427, 0.0026041667
    %v504 = vmul.f32 %v431, 0.0026041667
    %v505 = vmul.f32 %v435, 0.0026041667
    %v506 = vmul.f32 %v439, 0.0026041667
    %v507 = vmul.f32 %v443, 0.0026041667
    %v508 = vmul.f32 %v447, 0.0026041667
    %v509 = vmul.f32 %v451, 0.0026041667
    %v510 = vmul.f32 %v455, 0.0026041667
    %v511 = vmul.f32 %v459, 0.0026041667
    %v512 = vmul.f32 %v463, 0.0026041667
    %v513 = vmul.f32 %v467, 0.0026041667
    %v514 = vmul.f32 %v471, 0.0026041667
    %v515 = vmul.f32 %v475, 0.0026041667
    %v516 = vmul.f32 %v479, 0.0026041667
    %v517 = vmul.f32 %v483, 0.0026041667
    %v518 = vmul.f32 %v487, 0.0026041667
    %v519 = vmul.f32 %v494, 0.0026041667
    %v520 = vadd.f32 %v495, 1e-05
    %v521 = vadd.f32 %v496, 1e-05
    %v522 = vadd.f32 %v497, 1e-05
    %v523 = vadd.f32 %v498, 1e-05
    %v524 = vadd.f32 %v499, 1e-05
    %v525 = vadd.f32 %v500, 1e-05
    %v526 = vadd.f32 %v501, 1e-05
    %v527 = vadd.f32 %v502, 1e-05
    %v528 = vadd.f32 %v503, 1e-05
    %v529 = vadd.f32 %v504, 1e-05
    %v530 = vadd.f32 %v505, 1e-05
    %v531 = vadd.f32 %v506, 1e-05
    %v532 = vadd.f32 %v507, 1e-05
    %v533 = vadd.f32 %v508, 1e-05
    %v534 = vadd.f32 %v509, 1e-05
    %v535 = vadd.f32 %v510, 1e-05
    %v536 = vadd.f32 %v511, 1e-05
    %v537 = vadd.f32 %v512, 1e-05
    %v538 = vadd.f32 %v513, 1e-05
    %v539 = vadd.f32 %v514, 1e-05
    %v540 = vadd.f32 %v515, 1e-05
    %v541 = vadd.f32 %v516, 1e-05
    %v542 = vadd.f32 %v517, 1e-05
    %v543 = vadd.f32 %v518, 1e-05
    %v544 = vadd.f32 %v519, 1e-05
    %v545 = vrsqrt.pop %v520
    %v546 = vrsqrt.pop %v521
    %v547 = vrsqrt.pop %v522
    %v548 = vrsqrt.pop %v523
    %v549 = vrsqrt.pop %v524
    %v550 = vrsqrt.pop %v525
    %v551 = vrsqrt.pop %v526
    %v552 = vrsqrt.pop %v527
    %v553 = vrsqrt.pop %v528
    %v554 = vrsqrt.pop %v529
    %v555 = vrsqrt.pop %v530
    %v556 = vrsqrt.pop %v531
    %v557 = vrsqrt.pop %v532
    %v558 = vrsqrt.pop %v533
    %v559 = vrsqrt.pop %v534
    %v560 = vrsqrt.pop %v535
    %v561 = vrsqrt.pop %v536
    %v562 = vrsqrt.pop %v537
    %v563 = vrsqrt.pop %v538
    %v564 = vrsqrt.pop %v539
    %v565 = vrsqrt.pop %v540
    %v566 = vrsqrt.pop %v541
    %v567 = vrsqrt.pop %v542
    %v568 = vrsqrt.pop %v543
    %v569 = vrsqrt.pop %v544
    %v570 = vld [vmem:[#allocation5] ss:$2 sm:$0x7]
    %s571 = scalar_lea.vmem [#allocation5], 1
    %v572 = vld [vmem:[%s571] ss:$2 sm:$0x7]
    %v573 = vmul.f32 %v242, %v545
    %v574 = vmul.f32 %v243, %v545
    %v575 = vmul.f32 %v244, %v545
    %v576 = vmul.f32 %v245, %v546
    %v577 = vmul.f32 %v246, %v546
    %v578 = vmul.f32 %v247, %v546
    %v579 = vmul.f32 %v248, %v547
    %v580 = vmul.f32 %v249, %v547
    %v581 = vmul.f32 %v250, %v547
    %v582 = vmul.f32 %v251, %v548
    %v583 = vmul.f32 %v252, %v548
    %v584 = vmul.f32 %v253, %v548
    %v585 = vmul.f32 %v254, %v549
    %v586 = vmul.f32 %v255, %v549
    %v587 = vmul.f32 %v256, %v549
    %v588 = vmul.f32 %v257, %v550
    %v589 = vmul.f32 %v258, %v550
    %v590 = vmul.f32 %v259, %v550
    %v591 = vmul.f32 %v260, %v551
    %v592 = vmul.f32 %v261, %v551
    %v593 = vmul.f32 %v262, %v551
    %v594 = vmul.f32 %v263, %v552
    %v595 = vmul.f32 %v264, %v552
    %v596 = vmul.f32 %v265, %v552
    %v597 = vmul.f32 %v266, %v553
    %v598 = vmul.f32 %v267, %v553
    %v599 = vmul.f32 %v268, %v553
    %v600 = vmul.f32 %v269, %v554
    %v601 = vmul.f32 %v270, %v554
    %v602 = vmul.f32 %v271, %v554
    %v603 = vmul.f32 %v272, %v555
    %v604 = vmul.f32 %v273, %v555
    %v605 = vmul.f32 %v274, %v555
    %v606 = vmul.f32 %v275, %v556
    %v607 = vmul.f32 %v276, %v556
    %v608 = vmul.f32 %v277, %v556
    %v609 = vmul.f32 %v278, %v557
    %v610 = vmul.f32 %v279, %v557
    %v611 = vmul.f32 %v280, %v557
    %v612 = vmul.f32 %v281, %v558
    %v613 = vmul.f32 %v282, %v558
    %v614 = vmul.f32 %v283, %v558
    %v615 = vmul.f32 %v284, %v559
    %v616 = vmul.f32 %v285, %v559
    %v617 = vmul.f32 %v286, %v559
    %v618 = vmul.f32 %v287, %v560
    %v619 = vmul.f32 %v288, %v560
    %v620 = vmul.f32 %v289, %v560
    %v621 = vmul.f32 %v290, %v561
    %v622 = vmul.f32 %v291, %v561
    %v623 = vmul.f32 %v292, %v561
    %v624 = vmul.f32 %v293, %v562
    %v625 = vmul.f32 %v294, %v562
    %v626 = vmul.f32 %v295, %v562
    %v627 = vmul.f32 %v296, %v563
    %v628 = vmul.f32 %v297, %v563
    %v629 = vmul.f32 %v298, %v563
    %v630 = vmul.f32 %v299, %v564
    %v631 = vmul.f32 %v300, %v564
    %v632 = vmul.f32 %v301, %v564
    %v633 = vmul.f32 %v302, %v565
    %v634 = vmul.f32 %v303, %v565
    %v635 = vmul.f32 %v304, %v565
    %v636 = vmul.f32 %v305, %v566
    %v637 = vmul.f32 %v306, %v566
    %v638 = vmul.f32 %v307, %v566
    %v639 = vmul.f32 %v308, %v567
    %v640 = vmul.f32 %v309, %v567
    %v641 = vmul.f32 %v310, %v567
    %v642 = vmul.f32 %v311, %v568
    %v643 = vmul.f32 %v312, %v568
    %v644 = vmul.f32 %v313, %v568
    %v645 = vmul.f32 %v314, %v569
    %v646 = vmul.f32 %v315, %v569
    %v647 = vmul.f32 %v316, %v569
    %v649 = vlaneseq
    %v650 = vshrl.u32 %v649, 7
    %v651 = vsub.s32 0, %v650
    %v652 = vrot.slane %v570, %v651
    %v653 = vlaneseq
    %v654 = vshrl.u32 %v653, 7
    %v655 = vsub.s32 1, %v654
    %v656 = vrot.slane %v570, %v655
    %v657 = vlaneseq
    %v658 = vshrl.u32 %v657, 7
    %v659 = vsub.s32 2, %v658
    %v660 = vrot.slane %v570, %v659
    %v664 = vmul.f32 %v573, %v652
    %v665 = vmul.f32 %v574, %v656
    %v666 = vmul.f32 %v575, %v660
    %v667 = vmul.f32 %v576, %v652
    %v668 = vmul.f32 %v577, %v656
    %v669 = vmul.f32 %v578, %v660
    %v670 = vmul.f32 %v579, %v652
    %v671 = vmul.f32 %v580, %v656
    %v672 = vmul.f32 %v581, %v660
    %v673 = vmul.f32 %v582, %v652
    %v674 = vmul.f32 %v583, %v656
    %v675 = vmul.f32 %v584, %v660
    %v676 = vmul.f32 %v585, %v652
    %v677 = vmul.f32 %v586, %v656
    %v678 = vmul.f32 %v587, %v660
    %v679 = vmul.f32 %v588, %v652
    %v680 = vmul.f32 %v589, %v656
    %v681 = vmul.f32 %v590, %v660
    %v682 = vmul.f32 %v591, %v652
    %v683 = vmul.f32 %v592, %v656
    %v684 = vmul.f32 %v593, %v660
    %v685 = vmul.f32 %v594, %v652
    %v686 = vmul.f32 %v595, %v656
    %v687 = vmul.f32 %v596, %v660
    %v688 = vmul.f32 %v597, %v652
    %v689 = vmul.f32 %v598, %v656
    %v690 = vmul.f32 %v599, %v660
    %v691 = vmul.f32 %v600, %v652
    %v692 = vmul.f32 %v601, %v656
    %v693 = vmul.f32 %v602, %v660
    %v694 = vmul.f32 %v603, %v652
    %v695 = vmul.f32 %v604, %v656
    %v696 = vmul.f32 %v605, %v660
    %v697 = vmul.f32 %v606, %v652
    %v698 = vmul.f32 %v607, %v656
    %v699 = vmul.f32 %v608, %v660
    %v700 = vmul.f32 %v609, %v652
    %v701 = vmul.f32 %v610, %v656
    %v702 = vmul.f32 %v611, %v660
    %v703 = vmul.f32 %v612, %v652
    %v704 = vmul.f32 %v613, %v656
    %v705 = vmul.f32 %v614, %v660
    %v706 = vmul.f32 %v615, %v652
    %v707 = vmul.f32 %v616, %v656
    %v708 = vmul.f32 %v617, %v660
    %v709 = vmul.f32 %v618, %v652
    %v710 = vmul.f32 %v619, %v656
    %v711 = vmul.f32 %v620, %v660
    %v712 = vmul.f32 %v621, %v652
    %v713 = vmul.f32 %v622, %v656
    %v714 = vmul.f32 %v623, %v660
    %v715 = vmul.f32 %v624, %v652
    %v716 = vmul.f32 %v625, %v656
    %v717 = vmul.f32 %v626, %v660
    %v718 = vmul.f32 %v627, %v652
    %v719 = vmul.f32 %v628, %v656
    %v720 = vmul.f32 %v629, %v660
    %v721 = vmul.f32 %v630, %v652
    %v722 = vmul.f32 %v631, %v656
    %v723 = vmul.f32 %v632, %v660
    %v724 = vmul.f32 %v633, %v652
    %v725 = vmul.f32 %v634, %v656
    %v726 = vmul.f32 %v635, %v660
    %v727 = vmul.f32 %v636, %v652
    %v728 = vmul.f32 %v637, %v656
    %v729 = vmul.f32 %v638, %v660
    %v730 = vmul.f32 %v639, %v652
    %v731 = vmul.f32 %v640, %v656
    %v732 = vmul.f32 %v641, %v660
    %v733 = vmul.f32 %v642, %v652
    %v734 = vmul.f32 %v643, %v656
    %v735 = vmul.f32 %v644, %v660
    %v736 = vmul.f32 %v645, %v652
    %v737 = vmul.f32 %v646, %v656
    %v738 = vmul.f32 %v647, %v660
    %v740 = vlaneseq
    %v741 = vshrl.u32 %v740, 7
    %v742 = vsub.s32 0, %v741
    %v743 = vrot.slane %v572, %v742
    %v744 = vlaneseq
    %v745 = vshrl.u32 %v744, 7
    %v746 = vsub.s32 1, %v745
    %v747 = vrot.slane %v572, %v746
    %v748 = vlaneseq
    %v749 = vshrl.u32 %v748, 7
    %v750 = vsub.s32 2, %v749
    %v751 = vrot.slane %v572, %v750
    %v755 = vadd.f32 %v664, %v743
    %v756 = vadd.f32 %v665, %v747
    %v757 = vadd.f32 %v666, %v751
    %v758 = vadd.f32 %v667, %v743
    %v759 = vadd.f32 %v668, %v747
    %v760 = vadd.f32 %v669, %v751
    %v761 = vadd.f32 %v670, %v743
    %v762 = vadd.f32 %v671, %v747
    %v763 = vadd.f32 %v672, %v751
    %v764 = vadd.f32 %v673, %v743
    %v765 = vadd.f32 %v674, %v747
    %v766 = vadd.f32 %v675, %v751
    %v767 = vadd.f32 %v676, %v743
    %v768 = vadd.f32 %v677, %v747
    %v769 = vadd.f32 %v678, %v751
    %v770 = vadd.f32 %v679, %v743
    %v771 = vadd.f32 %v680, %v747
    %v772 = vadd.f32 %v681, %v751
    %v773 = vadd.f32 %v682, %v743
    %v774 = vadd.f32 %v683, %v747
    %v775 = vadd.f32 %v684, %v751
    %v776 = vadd.f32 %v685, %v743
    %v777 = vadd.f32 %v686, %v747
    %v778 = vadd.f32 %v687, %v751
    %v779 = vadd.f32 %v688, %v743
    %v780 = vadd.f32 %v689, %v747
    %v781 = vadd.f32 %v690, %v751
    %v782 = vadd.f32 %v691, %v743
    %v783 = vadd.f32 %v692, %v747
    %v784 = vadd.f32 %v693, %v751
    %v785 = vadd.f32 %v694, %v743
    %v786 = vadd.f32 %v695, %v747
    %v787 = vadd.f32 %v696, %v751
    %v788 = vadd.f32 %v697, %v743
    %v789 = vadd.f32 %v698, %v747
    %v790 = vadd.f32 %v699, %v751
    %v791 = vadd.f32 %v700, %v743
    %v792 = vadd.f32 %v701, %v747
    %v793 = vadd.f32 %v702, %v751
    %v794 = vadd.f32 %v703, %v743
    %v795 = vadd.f32 %v704, %v747
    %v796 = vadd.f32 %v705, %v751
    %v797 = vadd.f32 %v706, %v743
    %v798 = vadd.f32 %v707, %v747
    %v799 = vadd.f32 %v708, %v751
    %v800 = vadd.f32 %v709, %v743
    %v801 = vadd.f32 %v710, %v747
    %v802 = vadd.f32 %v711, %v751
    %v803 = vadd.f32 %v712, %v743
    %v804 = vadd.f32 %v713, %v747
    %v805 = vadd.f32 %v714, %v751
    %v806 = vadd.f32 %v715, %v743
    %v807 = vadd.f32 %v716, %v747
    %v808 = vadd.f32 %v717, %v751
    %v809 = vadd.f32 %v718, %v743
    %v810 = vadd.f32 %v719, %v747
    %v811 = vadd.f32 %v720, %v751
    %v812 = vadd.f32 %v721, %v743
    %v813 = vadd.f32 %v722, %v747
    %v814 = vadd.f32 %v723, %v751
    %v815 = vadd.f32 %v724, %v743
    %v816 = vadd.f32 %v725, %v747
    %v817 = vadd.f32 %v726, %v751
    %v818 = vadd.f32 %v727, %v743
    %v819 = vadd.f32 %v728, %v747
    %v820 = vadd.f32 %v729, %v751
    %v821 = vadd.f32 %v730, %v743
    %v822 = vadd.f32 %v731, %v747
    %v823 = vadd.f32 %v732, %v751
    %v824 = vadd.f32 %v733, %v743
    %v825 = vadd.f32 %v734, %v747
    %v826 = vadd.f32 %v735, %v751
    %v827 = vadd.f32 %v736, %v743
    %v828 = vadd.f32 %v737, %v747
    %v829 = vadd.f32 %v738, %v751
    %830 = vst [vmem:[#allocation7] sm:$0xff] %v755
    %831 = vst [vmem:[#allocation7 + $0x8] sm:$0xff] %v756
    %832 = vst [vmem:[#allocation7 + $0x10] sm:$0xff] %v757
    %833 = vst [vmem:[#allocation7 + $0x18] sm:$0xff] %v758
    %834 = vst [vmem:[#allocation7 + $0x20] sm:$0xff] %v759
    %835 = vst [vmem:[#allocation7 + $0x28] sm:$0xff] %v760
    %836 = vst [vmem:[#allocation7 + $0x30] sm:$0xff] %v761
    %837 = vst [vmem:[#allocation7 + $0x38] sm:$0xff] %v762
    %838 = vst [vmem:[#allocation7 + $0x40] sm:$0xff] %v763
    %839 = vst [vmem:[#allocation7 + $0x48] sm:$0xff] %v764
    %840 = vst [vmem:[#allocation7 + $0x50] sm:$0xff] %v765
    %841 = vst [vmem:[#allocation7 + $0x58] sm:$0xff] %v766
    %842 = vst [vmem:[#allocation7 + $0x60] sm:$0xff] %v767
    %843 = vst [vmem:[#allocation7 + $0x68] sm:$0xff] %v768
    %844 = vst [vmem:[#allocation7 + $0x70] sm:$0xff] %v769
    %845 = vst [vmem:[#allocation7 + $0x78] sm:$0xff] %v770
    %846 = vst [vmem:[#allocation7 + $0x80] sm:$0xff] %v771
    %847 = vst [vmem:[#allocation7 + $0x88] sm:$0xff] %v772
    %848 = vst [vmem:[#allocation7 + $0x90] sm:$0xff] %v773
    %849 = vst [vmem:[#allocation7 + $0x98] sm:$0xff] %v774
    %850 = vst [vmem:[#allocation7 + $0xa0] sm:$0xff] %v775
    %851 = vst [vmem:[#allocation7 + $0xa8] sm:$0xff] %v776
    %852 = vst [vmem:[#allocation7 + $0xb0] sm:$0xff] %v777
    %853 = vst [vmem:[#allocation7 + $0xb8] sm:$0xff] %v778
    %854 = vst [vmem:[#allocation7 + $0xc0] sm:$0xff] %v779
    %855 = vst [vmem:[#allocation7 + $0xc8] sm:$0xff] %v780
    %856 = vst [vmem:[#allocation7 + $0xd0] sm:$0xff] %v781
    %857 = vst [vmem:[#allocation7 + $0xd8] sm:$0xff] %v782
    %858 = vst [vmem:[#allocation7 + $0xe0] sm:$0xff] %v783
    %859 = vst [vmem:[#allocation7 + $0xe8] sm:$0xff] %v784
    %860 = vst [vmem:[#allocation7 + $0xf0] sm:$0xff] %v785
    %861 = vst [vmem:[#allocation7 + $0xf8] sm:$0xff] %v786
    %862 = vst [vmem:[#allocation7 + $0x100] sm:$0xff] %v787
    %863 = vst [vmem:[#allocation7 + $0x108] sm:$0xff] %v788
    %864 = vst [vmem:[#allocation7 + $0x110] sm:$0xff] %v789
    %865 = vst [vmem:[#allocation7 + $0x118] sm:$0xff] %v790
    %866 = vst [vmem:[#allocation7 + $0x120] sm:$0xff] %v791
    %867 = vst [vmem:[#allocation7 + $0x128] sm:$0xff] %v792
    %868 = vst [vmem:[#allocation7 + $0x130] sm:$0xff] %v793
    %869 = vst [vmem:[#allocation7 + $0x138] sm:$0xff] %v794
    %870 = vst [vmem:[#allocation7 + $0x140] sm:$0xff] %v795
    %871 = vst [vmem:[#allocation7 + $0x148] sm:$0xff] %v796
    %872 = vst [vmem:[#allocation7 + $0x150] sm:$0xff] %v797
    %873 = vst [vmem:[#allocation7 + $0x158] sm:$0xff] %v798
    %874 = vst [vmem:[#allocation7 + $0x160] sm:$0xff] %v799
    %875 = vst [vmem:[#allocation7 + $0x168] sm:$0xff] %v800
    %876 = vst [vmem:[#allocation7 + $0x170] sm:$0xff] %v801
    %877 = vst [vmem:[#allocation7 + $0x178] sm:$0xff] %v802
    %878 = vst [vmem:[#allocation7 + $0x180] sm:$0xff] %v803
    %879 = vst [vmem:[#allocation7 + $0x188] sm:$0xff] %v804
    %880 = vst [vmem:[#allocation7 + $0x190] sm:$0xff] %v805
    %881 = vst [vmem:[#allocation7 + $0x198] sm:$0xff] %v806
    %882 = vst [vmem:[#allocation7 + $0x1a0] sm:$0xff] %v807
    %883 = vst [vmem:[#allocation7 + $0x1a8] sm:$0xff] %v808
    %884 = vst [vmem:[#allocation7 + $0x1b0] sm:$0xff] %v809
    %885 = vst [vmem:[#allocation7 + $0x1b8] sm:$0xff] %v810
    %886 = vst [vmem:[#allocation7 + $0x1c0] sm:$0xff] %v811
    %887 = vst [vmem:[#allocation7 + $0x1c8] sm:$0xff] %v812
    %888 = vst [vmem:[#allocation7 + $0x1d0] sm:$0xff] %v813
    %889 = vst [vmem:[#allocation7 + $0x1d8] sm:$0xff] %v814
    %890 = vst [vmem:[#allocation7 + $0x1e0] sm:$0xff] %v815
    %891 = vst [vmem:[#allocation7 + $0x1e8] sm:$0xff] %v816
    %892 = vst [vmem:[#allocation7 + $0x1f0] sm:$0xff] %v817
    %893 = vst [vmem:[#allocation7 + $0x1f8] sm:$0xff] %v818
    %894 = vst [vmem:[#allocation7 + $0x200] sm:$0xff] %v819
    %895 = vst [vmem:[#allocation7 + $0x208] sm:$0xff] %v820
    %896 = vst [vmem:[#allocation7 + $0x210] sm:$0xff] %v821
    %897 = vst [vmem:[#allocation7 + $0x218] sm:$0xff] %v822
    %898 = vst [vmem:[#allocation7 + $0x220] sm:$0xff] %v823
    %899 = vst [vmem:[#allocation7 + $0x228] sm:$0xff] %v824
    %900 = vst [vmem:[#allocation7 + $0x230] sm:$0xff] %v825
    %901 = vst [vmem:[#allocation7 + $0x238] sm:$0xff] %v826
    %902 = vst [vmem:[#allocation7 + $0x240] sm:$0xf] %v827
    %903 = vst [vmem:[#allocation7 + $0x248] sm:$0xf] %v828
    %904 = vst [vmem:[#allocation7 + $0x250] sm:$0xf] %v829
    // Predicated region
    $region18: #{tpu_custom_call.1} parent=1 // pred_check
      _
    $region19: #{tpu_custom_call.1} parent=1 // pred_check_branch
      %906 = sbr.rel (0) target = $region21
    $region20: #{tpu_custom_call.1} parent=1 // pred_region
      %s908 = ssub.s32 9600, 9600
      %909 = vsyncadd [#allocation4], %s908
      %s910 = sshll.u32 [#allocation7], 4
      %s911 = int_to_ptr.vmem [resolvable:$true] %s910
      %916 = dma.vmem_to_hbm [thread:$0]  %s911, 9600, %s2, [#allocation4], 384, 384, 24
    $region21: #{tpu_custom_call.1} parent=1 // pred_fallthru
      _
    // Predicated region
    $region22: #{tpu_custom_call.1} parent=1 // pred_check
      _
    $region23: #{tpu_custom_call.1} parent=1 // pred_check_branch
      %918 = sbr.rel (0) target = $region25
    $region24: #{tpu_custom_call.1} parent=1 // pred_region
      %919 = dma.done [#allocation4], 9600
    $region25: #{tpu_custom_call.1} parent=1 // pred_fallthru
      _
    %920 = vsyncpa [#allocation3], 1
    %921 = vsyncpa [#allocation6], 1
    %922 = vsyncpa [#allocation4], 1

</llo_original>
